<compile_context>
chip_gen: v7x
topology: tpu7x:2x2x1
jax: 0.10.0
libtpu: 0.0.40
codegen_flags: <defaults>
</compile_context>

<pallas_src>
import functools

import jax
import jax.numpy as jnp
from jax.experimental import pallas as pl
from jax.experimental.pallas import tpu as pltpu

_LANE = 128


def _round_up(v, m):
    return (v + m - 1) // m * m


def _dense_graph_conv_kernel(adj_ref, x_ref, w_ref, b_ref, out_ref,
                             *, f_out, deg_in_mxu):
    # adj_ref: [Bt, N, N]        f32 (cast to bf16 in-register for the MXU)
    # x_ref:   [Bt, N, Fi_p]     bf16 (lane-padded)
    # w_ref:   [Fi_p, 2*Fo_p]    bf16  = [W_rel^T | W_root^T]
    # b_ref:   [1, Fo_p]         f32
    # out_ref: [Bt, N, Fo_p]     f32 (lane-dense stores)
    bt, n, fi_p = x_ref.shape
    fo_p = out_ref.shape[-1]

    # Fused projection (one MXU pass, K = F_in, f32 accumulation).
    x2d = x_ref[...].reshape(bt * n, fi_p)
    xw = jnp.dot(x2d, w_ref[...], preferred_element_type=jnp.float32)
    xw = xw.reshape(bt, n, 2 * fo_p)
    rel = xw[..., :fo_p]          # lin_rel applied to x (pre-aggregation)
    root = xw[..., fo_p:]         # lin_root(x)

    # Aggregation: adj @ rel.  A spare padded lane carries ones so the row
    # degree (adj @ 1) comes out of the same f32-accumulating MXU pass.
    if deg_in_mxu:
        lane = jax.lax.broadcasted_iota(jnp.int32, (bt, n, fo_p), dimension=2)
        rel_op = jnp.where(lane == f_out, 1.0, rel).astype(jnp.bfloat16)
    else:
        rel_op = rel.astype(jnp.bfloat16)

    adj_bf = adj_ref[...].astype(jnp.bfloat16)
    agg = jnp.einsum("bij,bjf->bif", adj_bf, rel_op,
                     preferred_element_type=jnp.float32)   # [Bt, N, Fo_p]

    if deg_in_mxu:
        deg = agg[..., f_out:f_out + 1]                     # adj.sum(-1), f32
    else:
        deg = jnp.sum(adj_ref[...], axis=-1, keepdims=True)
    deg = jnp.maximum(deg, 1.0)                             # clamp(min=1)

    out = agg * pl.reciprocal(deg, approx=False) + root + b_ref[...]
    out_ref[...] = out.astype(out_ref.dtype)


@functools.partial(jax.jit, static_argnames=("batch_tile", "vmem_limit_bytes"))
def dense_graph_conv(x, adj, w_rel, b_rel, w_root, *,
                     batch_tile=4, vmem_limit_bytes=48 * 1024 * 1024):
    """DenseGraphConv forward.

    x:      [B, N, F_in]   node features (f32)
    adj:    [B, N, N]      dense adjacency (f32)
    w_rel:  [F_out, F_in]  torch Linear layout
    b_rel:  [F_out]
    w_root: [F_out, F_in]
    returns [B, N, F_out]  (f32)
    """
    B, N, F_in = x.shape
    F_out = w_rel.shape[0]
    f32, bf16 = jnp.float32, jnp.bfloat16

    fi_p = _round_up(F_in, _LANE)
    fo_p = _round_up(F_out, _LANE)
    deg_in_mxu = F_out < fo_p  # spare padded lane available for adj @ 1

    # Largest divisor of B not exceeding batch_tile -> no batch padding, so
    # adj is never copied in HBM.
    bt = max(d for d in range(1, min(batch_tile, B) + 1) if B % d == 0)

    # Small tensors only: lane-pad + bf16-cast x and the stacked weights.
    x_p = jnp.zeros((B, N, fi_p), bf16).at[:, :, :F_in].set(x.astype(bf16))
    adj_f = adj.astype(f32)  # dominant tensor stays f32 + unpadded in HBM

    w_rel_t = jnp.zeros((fi_p, fo_p), f32).at[:F_in, :F_out].set(
        jnp.asarray(w_rel, f32).T)
    w_root_t = jnp.zeros((fi_p, fo_p), f32).at[:F_in, :F_out].set(
        jnp.asarray(w_root, f32).T)
    w_stack = jnp.concatenate([w_rel_t, w_root_t], axis=1).astype(bf16)
    b_p = jnp.zeros((1, fo_p), f32).at[0, :F_out].set(jnp.asarray(b_rel, f32))

    kernel = functools.partial(_dense_graph_conv_kernel,
                               f_out=F_out, deg_in_mxu=deg_in_mxu)

    out_p = pl.pallas_call(
        kernel,
        out_shape=jax.ShapeDtypeStruct((B, N, fo_p), f32),
        grid_spec=pltpu.PrefetchScalarGridSpec(
            num_scalar_prefetch=0,
            grid=(B // bt,),
            in_specs=[
                # adj: full-extent (N, N) block (satisfies the (8,128) rule).
                pl.BlockSpec((bt, N, N), lambda b: (b, 0, 0)),
                pl.BlockSpec((bt, N, fi_p), lambda b: (b, 0, 0)),
                pl.BlockSpec((fi_p, 2 * fo_p), lambda b: (0, 0)),
                pl.BlockSpec((1, fo_p), lambda b: (0, 0)),
            ],
            out_specs=pl.BlockSpec((bt, N, fo_p), lambda b: (b, 0, 0)),
        ),
        compiler_params=pltpu.CompilerParams(
            dimension_semantics=("parallel",),
            vmem_limit_bytes=vmem_limit_bytes,
        ),
    )(adj_f, x_p, w_stack, b_p)

    return out_p[:, :, :F_out]


def _glorot(key, shape):
    fan_in, fan_out = shape[1], shape[0]
    limit = jnp.sqrt(6.0 / (fan_in + fan_out))
    return jax.random.uniform(key, shape, jnp.float32, -limit, limit)


if __name__ == "__main__":
    B, N, F_in, F_out = 8, 16, 32, 32

    key = jax.random.PRNGKey(0)
    k_x, k_adj, k_rel, k_bias, k_root = jax.random.split(key, 5)

    x = jax.random.normal(k_x, (B, N, F_in), jnp.float32)
    # Dense (soft) adjacency: non-negative.
    adj = jax.nn.relu(jax.random.normal(k_adj, (B, N, N), jnp.float32))

    # Parameters (torch Linear layout: [out_dim, in_dim]).
    w_rel = _glorot(k_rel, (F_out, F_in))
    b_rel = 0.1 * jax.random.normal(k_bias, (F_out,), jnp.float32)
    w_root = _glorot(k_root, (F_out, F_in))

    out = dense_graph_conv(x, adj, w_rel, b_rel, w_root, batch_tile=4)
    out = jax.block_until_ready(out)
    assert out.shape == (B, N, F_out)

    # Reference 1: exact torch-module semantics in f32.  Tolerance covers the
    # intentional bf16 quantization of the matmul operands (~2^-9 relative).
    agg = jnp.einsum("bij,bjf->bif", adj, x)
    deg = jnp.maximum(jnp.sum(adj, axis=-1, keepdims=True), 1.0)
    ref_f32 = (agg / deg) @ w_rel.T + b_rel + x @ w_root.T
    assert jnp.allclose(out, ref_f32, atol=5e-2, rtol=5e-2), \
        "mismatch vs f32 torch-semantics reference"

    # Reference 2: same math with the kernel's bf16 operand rounding applied
    # (validates indexing / reassociation / degree trick at tight tolerance).
    q = lambda a: a.astype(jnp.bfloat16).astype(jnp.float32)
    xw_rel = q(x) @ q(w_rel.T)
    xw_root = q(x) @ q(w_root.T)
    deg_q = jnp.maximum(jnp.sum(q(adj), axis=-1, keepdims=True), 1.0)
    agg_q = jnp.einsum("bij,bjf->bif", q(adj), q(xw_rel))
    ref_q = agg_q / deg_q + xw_root + b_rel
    assert jnp.allclose(out, ref_q, atol=2e-3, rtol=2e-3), \
        "mismatch vs bf16-quantized reference"

    print("KERNEL_OK")
</pallas_src>

<mosaic_0001>
module attributes {stable_mosaic.version = 11 : i64} {
  func.func @_dense_graph_conv_kernel(%arg0: i32, %arg1: memref<4x16x16xf32, #tpu.memory_space<vmem>>, %arg2: memref<4x16x128xbf16, #tpu.memory_space<vmem>>, %arg3: memref<128x256xbf16, #tpu.memory_space<vmem>>, %arg4: memref<1x128xf32, #tpu.memory_space<vmem>>, %arg5: memref<4x16x128xf32, #tpu.memory_space<vmem>>) attributes {dimension_semantics = [#tpu.dimension_semantics<parallel>], iteration_bounds = array<i64: 2>, scalar_prefetch = 0 : i64, scratch_operands = 0 : i64, tpu.core_type = #tpu.core_type<tc>, window_params = [{transform_indices = @transform_0, window_bounds = array<i64: 4, 16, 16>}, {transform_indices = @transform_1, window_bounds = array<i64: 4, 16, 128>}, {pipeline_mode = #tpu.pipeline_mode<synchronous>, transform_indices = @transform_2, window_bounds = array<i64: 128, 256>}, {pipeline_mode = #tpu.pipeline_mode<synchronous>, transform_indices = @transform_3, window_bounds = array<i64: 1, 128>}, {transform_indices = @transform_4, window_bounds = array<i64: 4, 16, 128>}]} {
    %c0 = arith.constant 0 : index
    %c0_0 = arith.constant 0 : index
    %c0_1 = arith.constant 0 : index
    %0 = vector.load %arg2[%c0, %c0_0, %c0_1] : memref<4x16x128xbf16, #tpu.memory_space<vmem>>, vector<4x16x128xbf16>
    %1 = vector.shape_cast %0 : vector<4x16x128xbf16> to vector<64x128xbf16>
    %c0_2 = arith.constant 0 : index
    %c0_3 = arith.constant 0 : index
    %2 = vector.load %arg3[%c0_2, %c0_3] : memref<128x256xbf16, #tpu.memory_space<vmem>>, vector<128x256xbf16>
    %cst = arith.constant dense<0.000000e+00> : vector<64x256xf32>
    %3 = tpu.matmul %1, %2, %cst {dimension_numbers = #tpu.dot_dimension_numbers<[1], [0], [0], [1], [0, 0, 1, 1], [], []>} : vector<64x128xbf16>, vector<128x256xbf16>, vector<64x256xf32> -> vector<64x256xf32>
    %4 = vector.shape_cast %3 : vector<64x256xf32> to vector<4x16x256xf32>
    %5 = vector.extract_strided_slice %4 {offsets = [0, 0, 0], sizes = [4, 16, 128], strides = [1, 1, 1]} : vector<4x16x256xf32> to vector<4x16x128xf32>
    %6 = vector.extract_strided_slice %4 {offsets = [0, 0, 128], sizes = [4, 16, 128], strides = [1, 1, 1]} : vector<4x16x256xf32> to vector<4x16x128xf32>
    %7 = tpu.iota {dimensions = array<i32: 2>} : vector<4x16x128xi32>
    %c32_i32 = arith.constant 32 : i32
    %8 = vector.broadcast %c32_i32 : i32 to vector<4x16x128xi32>
    %9 = arith.cmpi eq, %7, %8 : vector<4x16x128xi32>
    %cst_4 = arith.constant 1.000000e+00 : f32
    %10 = vector.broadcast %cst_4 : f32 to vector<4x16x128xf32>
    %11 = arith.select %9, %10, %5 : vector<4x16x128xi1>, vector<4x16x128xf32>
    %12 = arith.truncf %11 : vector<4x16x128xf32> to vector<4x16x128xbf16>
    %c0_5 = arith.constant 0 : index
    %c0_6 = arith.constant 0 : index
    %c0_7 = arith.constant 0 : index
    %13 = vector.load %arg1[%c0_5, %c0_6, %c0_7] : memref<4x16x16xf32, #tpu.memory_space<vmem>>, vector<4x16x16xf32>
    %14 = arith.truncf %13 : vector<4x16x16xf32> to vector<4x16x16xbf16>
    "tpu.trace_start"() <{level = 10 : i32, message = "bij,bjf->bif"}> : () -> ()
    %cst_8 = arith.constant dense<0.000000e+00> : vector<4x16x128xf32>
    %15 = tpu.matmul %14, %12, %cst_8 {dimension_numbers = #tpu.dot_dimension_numbers<[2], [1], [1], [2], [0, 0, 0, 1, 1, 2], [0], [0]>} : vector<4x16x16xbf16>, vector<4x16x128xbf16>, vector<4x16x128xf32> -> vector<4x16x128xf32>
    "tpu.trace_stop"() : () -> ()
    %16 = vector.extract_strided_slice %15 {offsets = [0, 0, 32], sizes = [4, 16, 1], strides = [1, 1, 1]} : vector<4x16x128xf32> to vector<4x16x1xf32>
    %cst_9 = arith.constant 1.000000e+00 : f32
    %17 = vector.broadcast %cst_9 : f32 to vector<4x16x1xf32>
    %18 = arith.maximumf %16, %17 : vector<4x16x1xf32>
    %19 = tpu.reciprocal %18 : vector<4x16x1xf32> -> vector<4x16x1xf32>
    %20 = vector.broadcast %19 : vector<4x16x1xf32> to vector<4x16x128xf32>
    %21 = arith.mulf %15, %20 : vector<4x16x128xf32>
    %22 = arith.addf %21, %6 : vector<4x16x128xf32>
    %c0_10 = arith.constant 0 : index
    %c0_11 = arith.constant 0 : index
    %23 = vector.load %arg4[%c0_10, %c0_11] : memref<1x128xf32, #tpu.memory_space<vmem>>, vector<1x128xf32>
    %24 = vector.shape_cast %23 : vector<1x128xf32> to vector<1x1x128xf32>
    %25 = vector.broadcast %24 : vector<1x1x128xf32> to vector<4x16x128xf32>
    %26 = arith.addf %22, %25 : vector<4x16x128xf32>
    %c0_12 = arith.constant 0 : index
    %c0_13 = arith.constant 0 : index
    %c0_14 = arith.constant 0 : index
    %27 = vector.load %arg5[%c0_12, %c0_13, %c0_14] : memref<4x16x128xf32, #tpu.memory_space<vmem>>, vector<4x16x128xf32>
    tpu.vector_store %arg5[%c0_12, %c0_13, %c0_14], %26 {strides = array<i32>} : memref<4x16x128xf32, #tpu.memory_space<vmem>>, vector<4x16x128xf32>,
    return
  }
  func.func @transform_0(%arg0: i32) -> (i32, i32, i32) {
    %c0_i32 = arith.constant 0 : i32
    %c0_i32_0 = arith.constant 0 : i32
    %c0_i32_1 = arith.constant 0 : i32
    return %arg0, %c0_i32, %c0_i32_0 : i32, i32, i32
  }
  func.func @transform_1(%arg0: i32) -> (i32, i32, i32) {
    %c0_i32 = arith.constant 0 : i32
    %c0_i32_0 = arith.constant 0 : i32
    %c0_i32_1 = arith.constant 0 : i32
    return %arg0, %c0_i32, %c0_i32_0 : i32, i32, i32
  }
  func.func @transform_2(%arg0: i32) -> (i32, i32) {
    %c0_i32 = arith.constant 0 : i32
    %c0_i32_0 = arith.constant 0 : i32
    %c0_i32_1 = arith.constant 0 : i32
    return %c0_i32, %c0_i32_0 : i32, i32
  }
  func.func @transform_3(%arg0: i32) -> (i32, i32) {
    %c0_i32 = arith.constant 0 : i32
    %c0_i32_0 = arith.constant 0 : i32
    %c0_i32_1 = arith.constant 0 : i32
    return %c0_i32, %c0_i32_0 : i32, i32
  }
  func.func @transform_4(%arg0: i32) -> (i32, i32, i32) {
    %c0_i32 = arith.constant 0 : i32
    %c0_i32_0 = arith.constant 0 : i32
    %c0_i32_1 = arith.constant 0 : i32
    return %arg0, %c0_i32, %c0_i32_0 : i32, i32, i32
  }
}

</mosaic_0001>

<llo_original>
// kernel: dense_graph_conv.1
$region0: #{dense_graph_conv.1}
  #allocation0 [shape = 'u32[]', space=smem, size = 0x4, offset = 0x4, fixed_abs, tag = 'smem constant byte address 0x4 - core index']
  #allocation1 [shape = 'u32[144,128]{1,0:T(1,128)}', space=vmem, size = 0x12000, scoped, tag = 'internal scratch']
  %s0 = inlined_call_operand.vmem [shape: f32[8,16,16], index: 0, kind: input, shape index: {}]
  %s1 = inlined_call_operand.vmem [shape: bf16[8,16,128], index: 1, kind: input, shape index: {}]
  %s2 = inlined_call_operand.vmem [shape: bf16[128,256], index: 2, kind: input, shape index: {}]
  %s3 = inlined_call_operand.vmem [shape: f32[1,128], index: 3, kind: input, shape index: {}]
  %s4 = inlined_call_operand.hbm [shape: f32[8,16,128], index: 4, kind: output, shape index: {}]
  %s5 = sld [smem:[#allocation0]]
  $region49: #{dense_graph_conv.1} parent=0
    _
  %s7 = ssub.s32 1, %s5
  %s8 = scalar_select 0, %s7, %s5
  $region1: #{dense_graph_conv.1} parent=0
    #allocation2 [shape = 'u8[65536]{0}', space=vmem, size = 0x10000, scoped, tag = 'output window, operand 0']
    #allocation3 [shape = 's32[2]{0}', space=sflag, size = 0x8, scoped, tag = 'scoped memory for dense_graph_conv.1']
    %9 = vsyncpa [#allocation3], 0
    %s10 = scalar_lea.sflag [#allocation3], 1
    %11 = vsyncpa %s10, 0
    loop: start=0, step=1, limit=4
    $region2: #{dense_graph_conv.1} parent=1 // loop_pre_header
      _
    $region3: #{dense_graph_conv.1} parent=1 // loop_header
      %s13 = sphi 0, %s17
      %p14 = scmp.ge.s32.totalorder %s13, 4
      %s23 = sphi 0, %s25
      %s26 = sphi 0, %s23
      %s27 = sphi 0, %s26
      %s43 = sphi 0, %s27
      %s49 = sphi 0, %s51
      %s52 = sphi 0, %s49
      %s53 = sphi 0, %s52
      %s69 = sphi 0, %s53
      %s73 = sphi 0, %s73
      %s75 = sphi 0, %s73
      %s76 = sphi 0, %s75
      %s90 = sphi 0, %s76
      %s94 = sphi 0, %s94
      %s96 = sphi 0, %s94
      %s97 = sphi 0, %s96
      %s111 = sphi 0, %s97
      %s117 = sphi 0, %s119
      %s120 = sphi 0, %s117
      %s121 = sphi 0, %s120
      %s137 = sphi 0, %s121
    $region4: #{dense_graph_conv.1} parent=1 // loop_header_branch
      %16 = sbr.rel (%p14) target = $region8
    $region5: #{dense_graph_conv.1} parent=1 // loop_body
      %s18 = ssub.s32 %s13, 1
      %s19 = ssub.s32 %s13, 2
      %s20 = sadd.s32 %s13, 1
      %s21 = ssub.s32 %s13, %s20
      %p22 = scmp.eq.s32.totalorder %s21, 0
      %s24 = sadd.s32 %s23, 1
      %s25 = scalar_select %p22, %s23, %s24
      %p28 = pneg %p22
      %p29 = scmp.eq.s32.totalorder %s13, 1
      %p30 = por %p28, %p29
      %p31 = scmp.ne.s32.totalorder %s23, %s26
      %p32 = scmp.eq.s32.totalorder %s13, 0
      %p33 = por %p31, %p32
      %p34 = scmp.ne.s32.totalorder %s23, %s26
      %p35 = scmp.eq.s32.totalorder %s18, 1
      %p36 = por %p34, %p35
      %p37 = scmp.ne.s32.totalorder %s26, %s27
      %p38 = scmp.eq.s32.totalorder %s18, 0
      %p39 = por %p37, %p38
      %p40 = scmp.ne.s32.totalorder %s26, %s27
      %p41 = scmp.eq.s32.totalorder %s19, 1
      %p42 = por %p40, %p41
      %p44 = scmp.ne.s32.totalorder %s27, %s43
      %p45 = scmp.eq.s32.totalorder %s19, 0
      %p46 = por %p44, %p45
      %s47 = ssub.s32 %s13, %s20
      %p48 = scmp.eq.s32.totalorder %s47, 0
      %s50 = sadd.s32 %s49, 1
      %s51 = scalar_select %p48, %s49, %s50
      %p54 = pneg %p48
      %p55 = scmp.eq.s32.totalorder %s13, 1
      %p56 = por %p54, %p55
      %p57 = scmp.ne.s32.totalorder %s49, %s52
      %p58 = scmp.eq.s32.totalorder %s13, 0
      %p59 = por %p57, %p58
      %p60 = scmp.ne.s32.totalorder %s49, %s52
      %p61 = scmp.eq.s32.totalorder %s18, 1
      %p62 = por %p60, %p61
      %p63 = scmp.ne.s32.totalorder %s52, %s53
      %p64 = scmp.eq.s32.totalorder %s18, 0
      %p65 = por %p63, %p64
      %p66 = scmp.ne.s32.totalorder %s52, %s53
      %p67 = scmp.eq.s32.totalorder %s19, 1
      %p68 = por %p66, %p67
      %p70 = scmp.ne.s32.totalorder %s53, %s69
      %p71 = scmp.eq.s32.totalorder %s19, 0
      %p72 = por %p70, %p71
      %s74 = sadd.s32 %s73, 1
      %p77 = scmp.eq.s32.totalorder %s13, 1
      %p78 = scmp.ne.s32.totalorder %s73, %s75
      %p79 = scmp.eq.s32.totalorder %s13, 0
      %p80 = por %p78, %p79
      %p81 = scmp.ne.s32.totalorder %s73, %s75
      %p82 = scmp.eq.s32.totalorder %s18, 1
      %p83 = por %p81, %p82
      %p84 = scmp.ne.s32.totalorder %s75, %s76
      %p85 = scmp.eq.s32.totalorder %s18, 0
      %p86 = por %p84, %p85
      %p87 = scmp.ne.s32.totalorder %s75, %s76
      %p88 = scmp.eq.s32.totalorder %s19, 1
      %p89 = por %p87, %p88
      %p91 = scmp.ne.s32.totalorder %s76, %s90
      %p92 = scmp.eq.s32.totalorder %s19, 0
      %p93 = por %p91, %p92
      %s95 = sadd.s32 %s94, 1
      %p98 = scmp.eq.s32.totalorder %s13, 1
      %p99 = scmp.ne.s32.totalorder %s94, %s96
      %p100 = scmp.eq.s32.totalorder %s13, 0
      %p101 = por %p99, %p100
      %p102 = scmp.ne.s32.totalorder %s94, %s96
      %p103 = scmp.eq.s32.totalorder %s18, 1
      %p104 = por %p102, %p103
      %p105 = scmp.ne.s32.totalorder %s96, %s97
      %p106 = scmp.eq.s32.totalorder %s18, 0
      %p107 = por %p105, %p106
      %p108 = scmp.ne.s32.totalorder %s96, %s97
      %p109 = scmp.eq.s32.totalorder %s19, 1
      %p110 = por %p108, %p109
      %p112 = scmp.ne.s32.totalorder %s97, %s111
      %p113 = scmp.eq.s32.totalorder %s19, 0
      %p114 = por %p112, %p113
      %s115 = ssub.s32 %s13, %s20
      %p116 = scmp.eq.s32.totalorder %s115, 0
      %s118 = sadd.s32 %s117, 1
      %s119 = scalar_select %p116, %s117, %s118
      %p122 = pneg %p116
      %p123 = scmp.eq.s32.totalorder %s13, 1
      %p124 = por %p122, %p123
      %p125 = scmp.ne.s32.totalorder %s117, %s120
      %p126 = scmp.eq.s32.totalorder %s13, 0
      %p127 = por %p125, %p126
      %p128 = scmp.ne.s32.totalorder %s117, %s120
      %p129 = scmp.eq.s32.totalorder %s18, 1
      %p130 = por %p128, %p129
      %p131 = scmp.ne.s32.totalorder %s120, %s121
      %p132 = scmp.eq.s32.totalorder %s18, 0
      %p133 = por %p131, %p132
      %p134 = scmp.ne.s32.totalorder %s120, %s121
      %p135 = scmp.eq.s32.totalorder %s19, 1
      %p136 = por %p134, %p135
      %p138 = scmp.ne.s32.totalorder %s121, %s137
      %p139 = scmp.eq.s32.totalorder %s19, 0
      %p140 = por %p138, %p139
      %p141 = scmp.le.s32.totalorder 1, %s13
      %p142 = scmp.lt.s32.totalorder %s13, 3
      %p143 = pnand %p141, %p142
      %p144 = pneg %p143
      // Predicated region
      $region9: #{dense_graph_conv.1} parent=5 // pred_check
        _
      $region10: #{dense_graph_conv.1} parent=5 // pred_check_branch
        %146 = sbr.rel (%p143) target = $region12
      $region11: #{dense_graph_conv.1} parent=5 // pred_region
        %s147 = ssub.s32 %s13, 1
        // Predicated region
        $region13: #{dense_graph_conv.1} parent=11 // pred_check
          %p148 = pneg %p86
        $region14: #{dense_graph_conv.1} parent=11 // pred_check_branch
          %150 = sbr.rel (%p148) target = $region16
        $region15: #{dense_graph_conv.1} parent=11 // pred_region
          _
        $region16: #{dense_graph_conv.1} parent=11 // pred_fallthru
          _
        // Predicated region
        $region17: #{dense_graph_conv.1} parent=11 // pred_check
          %p151 = pneg %p107
        $region18: #{dense_graph_conv.1} parent=11 // pred_check_branch
          %153 = sbr.rel (%p151) target = $region20
        $region19: #{dense_graph_conv.1} parent=11 // pred_region
          _
        $region20: #{dense_graph_conv.1} parent=11 // pred_fallthru
          _
      $region12: #{dense_graph_conv.1} parent=5 // pred_fallthru
        _
      %p154 = scmp.lt.s32.totalorder %s13, 2
      // Predicated region
      $region21: #{dense_graph_conv.1} parent=5 // pred_check
        %p155 = pneg %p154
      $region22: #{dense_graph_conv.1} parent=5 // pred_check_branch
        %157 = sbr.rel (%p155) target = $region24
      $region23: #{dense_graph_conv.1} parent=5 // pred_region
        // Predicated region
        $region25: #{dense_graph_conv.1} parent=23 // pred_check
          %p158 = pneg %p33
        $region26: #{dense_graph_conv.1} parent=23 // pred_check_branch
          %160 = sbr.rel (%p158) target = $region28
        $region27: #{dense_graph_conv.1} parent=23 // pred_region
          %s161 = smul.u32 4, %s13
          %p162 = scmp.lt.s32.totalorder %s161, 7
          %s163 = scalar_select %p162, %s161, 7
          %s164 = smul.addr %s163, 2
          %s165 = smul.addr %s164, 8
          %s166 = scalar_lea.vmem %s0, %s165
          %s167 = smul.u32 4, %s13
        $region28: #{dense_graph_conv.1} parent=23 // pred_fallthru
          _
        // Predicated region
        $region29: #{dense_graph_conv.1} parent=23 // pred_check
          %p168 = pneg %p59
        $region30: #{dense_graph_conv.1} parent=23 // pred_check_branch
          %170 = sbr.rel (%p168) target = $region32
        $region31: #{dense_graph_conv.1} parent=23 // pred_region
          %s171 = smul.u32 4, %s13
          %p172 = scmp.lt.s32.totalorder %s171, 7
          %s173 = scalar_select %p172, %s171, 7
          %s174 = smul.addr %s173, 2
          %s175 = smul.addr %s174, 4
          %s176 = scalar_lea.vmem %s1, %s175
          %s177 = smul.u32 4, %s13
        $region32: #{dense_graph_conv.1} parent=23 // pred_fallthru
          _
      $region24: #{dense_graph_conv.1} parent=5 // pred_fallthru
        _
      %p178 = scmp.le.s32.totalorder 1, %s13
      %p179 = scmp.lt.s32.totalorder %s13, 3
      %p180 = pnand %p178, %p179
      %p181 = pneg %p180
      // Predicated region
      $region33: #{dense_graph_conv.1} parent=5 // pred_check
        _
      $region34: #{dense_graph_conv.1} parent=5 // pred_check_branch
        %183 = sbr.rel (%p180) target = $region36
      $region35: #{dense_graph_conv.1} parent=5 // pred_region
        %s184 = ssub.s32 %s13, 1
        %s185 = smul.u32 4, %s18
        %p186 = scmp.lt.s32.totalorder %s185, 7
        %s187 = scalar_select %p186, %s185, 7
        %s188 = smul.addr %s187, 2
        %s189 = smul.addr %s188, 8
        %s190 = scalar_lea.vmem %s0, %s189
        %p191 = pneg %p39
        %p192 = pneg %p36
        %s193 = smul.u32 4, %s18
        %p194 = scmp.lt.s32.totalorder %s193, 7
        %s195 = scalar_select %p194, %s193, 7
        %s196 = smul.addr %s195, 2
        %s197 = smul.addr %s196, 4
        %s198 = scalar_lea.vmem %s1, %s197
        %p199 = pneg %p65
        %p200 = pneg %p62
        %p201 = pneg %p86
        %p202 = pneg %p83
        %p203 = pneg %p107
        %p204 = pneg %p104
        %p205 = pneg %p133
        %p206 = pneg %p130
        %s207 = sand.u32 %s120, 1
        %s208 = scalar_lea.sflag [#allocation3], %s207
        %s209 = sand.u32 %s120, 1
        %s210 = smul.addr %s209, 64
        %s211 = scalar_lea.vmem [#allocation2], %s210
        %s212 = smul.u32 4, %s18
        %p213 = scmp.lt.s32.totalorder %s212, 7
        %s214 = scalar_select %p213, %s212, 7
        %s215 = smul.addr %s214, 2
        %s216 = smul.addr %s215, 8
        %s217 = scalar_lea.vmem %s0, %s216
        %s218 = smul.u32 4, %s18
        %s219 = smul.u32 4, %s18
        %p220 = scmp.lt.s32.totalorder %s219, 7
        %s221 = scalar_select %p220, %s219, 7
        %s222 = smul.addr %s221, 2
        %s223 = smul.addr %s222, 4
        %s224 = scalar_lea.vmem %s1, %s223
        %s225 = smul.u32 4, %s18
        %s226 = smul.u32 4, %s18
        %v228 = vld [vmem:[%s224] sm:$0xf]
        %v229 = vld [vmem:[%s224 + $0x4] sm:$0xf]
        %v230 = vld [vmem:[%s224 + $0x8] sm:$0xf]
        %v231 = vld [vmem:[%s224 + $0xc] sm:$0xf]
        %v232 = vld [vmem:[%s224 + $0x10] sm:$0xf]
        %v233 = vld [vmem:[%s224 + $0x14] sm:$0xf]
        %v234 = vld [vmem:[%s224 + $0x18] sm:$0xf]
        %v235 = vld [vmem:[%s224 + $0x1c] sm:$0xf]
        %v236 = vld [vmem:[%s2] sm:$0xff]
        %v237 = vld [vmem:[%s2 + $0x8] sm:$0xff]
        %v238 = vld [vmem:[%s2 + $0x10] sm:$0xff]
        %v239 = vld [vmem:[%s2 + $0x18] sm:$0xff]
        %v240 = vld [vmem:[%s2 + $0x20] sm:$0xff]
        %v241 = vld [vmem:[%s2 + $0x28] sm:$0xff]
        %v242 = vld [vmem:[%s2 + $0x30] sm:$0xff]
        %v243 = vld [vmem:[%s2 + $0x38] sm:$0xff]
        %v244 = vld [vmem:[%s2 + $0x40] sm:$0xff]
        %v245 = vld [vmem:[%s2 + $0x48] sm:$0xff]
        %v246 = vld [vmem:[%s2 + $0x50] sm:$0xff]
        %v247 = vld [vmem:[%s2 + $0x58] sm:$0xff]
        %v248 = vld [vmem:[%s2 + $0x60] sm:$0xff]
        %v249 = vld [vmem:[%s2 + $0x68] sm:$0xff]
        %v250 = vld [vmem:[%s2 + $0x70] sm:$0xff]
        %v251 = vld [vmem:[%s2 + $0x78] sm:$0xff]
        %v260 = vunpack.c.l.b16 %v228
        %v261 = vunpack.c.l.b16 %v229
        %v262 = vunpack.c.l.b16 %v230
        %v263 = vunpack.c.l.b16 %v231
        %v264 = vunpack.c.l.b16 %v232
        %v265 = vunpack.c.l.b16 %v233
        %v266 = vunpack.c.l.b16 %v234
        %v267 = vunpack.c.l.b16 %v235
        %v268 = vpack.c.b16 %v261, %v260
        %v269 = vpack.c.b16 %v263, %v262
        %v270 = vpack.c.b16 %v265, %v264
        %v271 = vpack.c.b16 %v267, %v266
        %v292 = vunpack.c.l.b16 %v236
        %v293 = vunpack.c.h.b16 %v236
        %v294 = vunpack.c.l.b16 %v237
        %v295 = vunpack.c.h.b16 %v237
        %v296 = vunpack.c.l.b16 %v238
        %v297 = vunpack.c.h.b16 %v238
        %v298 = vunpack.c.l.b16 %v239
        %v299 = vunpack.c.h.b16 %v239
        %v300 = vunpack.c.l.b16 %v240
        %v301 = vunpack.c.h.b16 %v240
        %v302 = vunpack.c.l.b16 %v241
        %v303 = vunpack.c.h.b16 %v241
        %v304 = vunpack.c.l.b16 %v242
        %v305 = vunpack.c.h.b16 %v242
        %v306 = vunpack.c.l.b16 %v243
        %v307 = vunpack.c.h.b16 %v243
        %v308 = vunpack.c.l.b16 %v244
        %v309 = vunpack.c.h.b16 %v244
        %v310 = vunpack.c.l.b16 %v245
        %v311 = vunpack.c.h.b16 %v245
        %v312 = vunpack.c.l.b16 %v246
        %v313 = vunpack.c.h.b16 %v246
        %v314 = vunpack.c.l.b16 %v247
        %v315 = vunpack.c.h.b16 %v247
        %v316 = vunpack.c.l.b16 %v248
        %v317 = vunpack.c.h.b16 %v248
        %v318 = vunpack.c.l.b16 %v249
        %v319 = vunpack.c.h.b16 %v249
        %v320 = vunpack.c.l.b16 %v250
        %v321 = vunpack.c.h.b16 %v250
        %v322 = vunpack.c.l.b16 %v251
        %v323 = vunpack.c.h.b16 %v251
        %v324 = vpack.c.b16 %v294, %v292
        %v325 = vpack.c.b16 %v295, %v293
        %v326 = vpack.c.b16 %v298, %v296
        %v327 = vpack.c.b16 %v299, %v297
        %v328 = vpack.c.b16 %v302, %v300
        %v329 = vpack.c.b16 %v303, %v301
        %v330 = vpack.c.b16 %v306, %v304
        %v331 = vpack.c.b16 %v307, %v305
        %v332 = vpack.c.b16 %v310, %v308
        %v333 = vpack.c.b16 %v311, %v309
        %v334 = vpack.c.b16 %v314, %v312
        %v335 = vpack.c.b16 %v315, %v313
        %v336 = vpack.c.b16 %v318, %v316
        %v337 = vpack.c.b16 %v319, %v317
        %v338 = vpack.c.b16 %v322, %v320
        %v339 = vpack.c.b16 %v323, %v321
        %356 = vmatprep.subr.bf16.mxu0 %v325
        %357 = vmatpush1.bf16.msra.mxu0 %v324
        %358 = vmatprep.subr.bf16.mxu0 %v327
        %359 = vmatpush1.bf16.msra.mxu0 %v326
        %360 = vmatprep.subr.bf16.mxu0 %v329
        %361 = vmatpush1.bf16.msra.mxu0 %v328
        %362 = vmatprep.subr.bf16.mxu0 %v331
        %363 = vmatpush1.bf16.msra.mxu0 %v330
        %364 = vmatprep.subr.bf16.mxu0 %v333
        %365 = vmatpush1.bf16.msra.mxu0 %v332
        %366 = vmatprep.subr.bf16.mxu0 %v335
        %367 = vmatpush1.bf16.msra.mxu0 %v334
        %368 = vmatprep.subr.bf16.mxu0 %v337
        %369 = vmatpush1.bf16.msra.mxu0 %v336
        %370 = vmatprep.subr.bf16.mxu0 %v339
        %371 = vmatpush1.bf16.msra.mxu0 %v338
        %372 = vmatprep.subr.bf16.mxu0 0
        %373 = vmatpush1.bf16.msra.mxu0 0
        %374 = vmatprep.subr.bf16.mxu0 0
        %375 = vmatpush1.bf16.msra.mxu0 0
        %376 = vmatprep.subr.bf16.mxu0 0
        %377 = vmatpush1.bf16.msra.mxu0 0
        %378 = vmatprep.subr.bf16.mxu0 0
        %379 = vmatpush1.bf16.msra.mxu0 0
        %380 = vmatprep.subr.bf16.mxu0 0
        %381 = vmatpush1.bf16.msra.mxu0 0
        %382 = vmatprep.subr.bf16.mxu0 0
        %383 = vmatpush1.bf16.msra.mxu0 0
        %384 = vmatprep.subr.bf16.mxu0 0
        %385 = vmatpush1.bf16.msra.mxu0 0
        %386 = vmatprep.subr.bf16.mxu0 0
        %387 = vmatpush1.bf16.msra.mxu0 0
        %388 = vmatprep.mubr.bf16.mxu0 0
        %389 = vmatmul.mubr.bf16.gmra.mrb[0].mxu0 %v268
        %v390 = vpop.f32.mrb[0].mxu0
        %v391 = vadd.f32 0.0, %v390
        %v392 = vpop.f32.mrb[0].mxu0
        %v393 = vadd.f32 0.0, %v392
        %v394 = vpop.f32.mrb[0].mxu0
        %v395 = vadd.f32 0.0, %v394
        %v396 = vpop.f32.mrb[0].mxu0
        %v397 = vadd.f32 0.0, %v396
        %398 = vmatprep.mubr.bf16.mxu0 0
        %399 = vmatmul.mubr.bf16.gmra.mrb[0].mxu0 %v269
        %v400 = vpop.f32.mrb[0].mxu0
        %v401 = vadd.f32 0.0, %v400
        %v402 = vpop.f32.mrb[0].mxu0
        %v403 = vadd.f32 0.0, %v402
        %v404 = vpop.f32.mrb[0].mxu0
        %v405 = vadd.f32 0.0, %v404
        %v406 = vpop.f32.mrb[0].mxu0
        %v407 = vadd.f32 0.0, %v406
        %408 = vmatprep.mubr.bf16.mxu0 0
        %409 = vmatmul.mubr.bf16.gmra.mrb[0].mxu0 %v270
        %v410 = vpop.f32.mrb[0].mxu0
        %v411 = vadd.f32 0.0, %v410
        %v412 = vpop.f32.mrb[0].mxu0
        %v413 = vadd.f32 0.0, %v412
        %v414 = vpop.f32.mrb[0].mxu0
        %v415 = vadd.f32 0.0, %v414
        %v416 = vpop.f32.mrb[0].mxu0
        %v417 = vadd.f32 0.0, %v416
        %418 = vmatprep.mubr.bf16.mxu0 0
        %419 = vmatmul.mubr.bf16.gmra.mrb[0].mxu0 %v271
        %v420 = vpop.f32.mrb[0].mxu0
        %v421 = vadd.f32 0.0, %v420
        %v422 = vpop.f32.mrb[0].mxu0
        %v423 = vadd.f32 0.0, %v422
        %v424 = vpop.f32.mrb[0].mxu0
        %v425 = vadd.f32 0.0, %v424
        %v426 = vpop.f32.mrb[0].mxu0
        %v427 = vadd.f32 0.0, %v426
        %428 = vdwg.mxu0
        %v429 = vlaneseq
        %v430 = vand.u32 %v429, 127
        %vm431 = vcmp.eq.s32.totalorder %v430, 32
        %v432 = vsel %vm431, 1.0, %v391
        %v433 = vsel %vm431, 1.0, %v395
        %v434 = vsel %vm431, 1.0, %v401
        %v435 = vsel %vm431, 1.0, %v405
        %v436 = vsel %vm431, 1.0, %v411
        %v437 = vsel %vm431, 1.0, %v415
        %v438 = vsel %vm431, 1.0, %v421
        %v439 = vsel %vm431, 1.0, %v425
        %v440 = vpack.c.bf16 %v433, %v432
        %v441 = vpack.c.bf16 %v435, %v434
        %v442 = vpack.c.bf16 %v437, %v436
        %v443 = vpack.c.bf16 %v439, %v438
        %v444 = vld [vmem:[%s217] sm:$0xff]
        %v445 = vld [vmem:[%s217 + $0x8] sm:$0xff]
        %v446 = vld [vmem:[%s217 + $0x10] sm:$0xff]
        %v447 = vld [vmem:[%s217 + $0x18] sm:$0xff]
        %v448 = vld [vmem:[%s217 + $0x20] sm:$0xff]
        %v449 = vld [vmem:[%s217 + $0x28] sm:$0xff]
        %v450 = vld [vmem:[%s217 + $0x30] sm:$0xff]
        %v451 = vld [vmem:[%s217 + $0x38] sm:$0xff]
        %v452 = vpack.c.bf16 %v445, %v444
        %v453 = vpack.c.bf16 %v447, %v446
        %v454 = vpack.c.bf16 %v449, %v448
        %v455 = vpack.c.bf16 %v451, %v450
        %vm456 = vcmask 130048
        %v458 = vsel %vm456, %v452, 0
        %460 = vmatprep.subr.bf16.mxu0 0
        %461 = vmatpush1.bf16.msra.mxu0 %v440
        %462 = vmatprep.subr.bf16.mxu0 0
        %463 = vmatpush1.bf16.msra.mxu0 0
        %464 = vmatprep.subr.bf16.mxu0 0
        %465 = vmatpush1.bf16.msra.mxu0 0
        %466 = vmatprep.subr.bf16.mxu0 0
        %467 = vmatpush1.bf16.msra.mxu0 0
        %468 = vmatprep.subr.bf16.mxu0 0
        %469 = vmatpush1.bf16.msra.mxu0 0
        %470 = vmatprep.subr.bf16.mxu0 0
        %471 = vmatpush1.bf16.msra.mxu0 0
        %472 = vmatprep.subr.bf16.mxu0 0
        %473 = vmatpush1.bf16.msra.mxu0 0
        %474 = vmatprep.subr.bf16.mxu0 0
        %475 = vmatpush1.bf16.msra.mxu0 0
        %476 = vmatprep.subr.bf16.mxu0 0
        %477 = vmatpush1.bf16.msra.mxu0 0
        %478 = vmatprep.subr.bf16.mxu0 0
        %479 = vmatpush1.bf16.msra.mxu0 0
        %480 = vmatprep.subr.bf16.mxu0 0
        %481 = vmatpush1.bf16.msra.mxu0 0
        %482 = vmatprep.subr.bf16.mxu0 0
        %483 = vmatpush1.bf16.msra.mxu0 0
        %484 = vmatprep.subr.bf16.mxu0 0
        %485 = vmatpush1.bf16.msra.mxu0 0
        %486 = vmatprep.subr.bf16.mxu0 0
        %487 = vmatpush1.bf16.msra.mxu0 0
        %488 = vmatprep.subr.bf16.mxu0 0
        %489 = vmatpush1.bf16.msra.mxu0 0
        %490 = vmatprep.subr.bf16.mxu0 0
        %491 = vmatpush1.bf16.msra.mxu0 0
        %492 = vmatprep.mubr.bf16.mxu0 0
        %493 = vmatmul.mubr.bf16.gmra.mrb[0].mxu0 %v458
        %v494 = vpop.f32.mrb[0].mxu0
        %v495 = vadd.f32 0.0, %v494
        %v496 = vpop.f32.mrb[0].mxu0
        %v497 = vpop.f32.mrb[0].mxu0
        %v498 = vadd.f32 0.0, %v497
        %v499 = vpop.f32.mrb[0].mxu0
        %500 = vdwg.mxu0
        %v502 = vsel %vm456, %v453, 0
        %504 = vmatprep.subr.bf16.mxu0 0
        %505 = vmatpush1.bf16.msra.mxu0 %v441
        %506 = vmatprep.subr.bf16.mxu0 0
        %507 = vmatpush1.bf16.msra.mxu0 0
        %508 = vmatprep.subr.bf16.mxu0 0
        %509 = vmatpush1.bf16.msra.mxu0 0
        %510 = vmatprep.subr.bf16.mxu0 0
        %511 = vmatpush1.bf16.msra.mxu0 0
        %512 = vmatprep.subr.bf16.mxu0 0
        %513 = vmatpush1.bf16.msra.mxu0 0
        %514 = vmatprep.subr.bf16.mxu0 0
        %515 = vmatpush1.bf16.msra.mxu0 0
        %516 = vmatprep.subr.bf16.mxu0 0
        %517 = vmatpush1.bf16.msra.mxu0 0
        %518 = vmatprep.subr.bf16.mxu0 0
        %519 = vmatpush1.bf16.msra.mxu0 0
        %520 = vmatprep.subr.bf16.mxu0 0
        %521 = vmatpush1.bf16.msra.mxu0 0
        %522 = vmatprep.subr.bf16.mxu0 0
        %523 = vmatpush1.bf16.msra.mxu0 0
        %524 = vmatprep.subr.bf16.mxu0 0
        %525 = vmatpush1.bf16.msra.mxu0 0
        %526 = vmatprep.subr.bf16.mxu0 0
        %527 = vmatpush1.bf16.msra.mxu0 0
        %528 = vmatprep.subr.bf16.mxu0 0
        %529 = vmatpush1.bf16.msra.mxu0 0
        %530 = vmatprep.subr.bf16.mxu0 0
        %531 = vmatpush1.bf16.msra.mxu0 0
        %532 = vmatprep.subr.bf16.mxu0 0
        %533 = vmatpush1.bf16.msra.mxu0 0
        %534 = vmatprep.subr.bf16.mxu0 0
        %535 = vmatpush1.bf16.msra.mxu0 0
        %536 = vmatprep.mubr.bf16.mxu0 0
        %537 = vmatmul.mubr.bf16.gmra.mrb[0].mxu0 %v502
        %v538 = vpop.f32.mrb[0].mxu0
        %v539 = vadd.f32 0.0, %v538
        %v540 = vpop.f32.mrb[0].mxu0
        %v541 = vpop.f32.mrb[0].mxu0
        %v542 = vadd.f32 0.0, %v541
        %v543 = vpop.f32.mrb[0].mxu0
        %544 = vdwg.mxu0
        %v546 = vsel %vm456, %v454, 0
        %548 = vmatprep.subr.bf16.mxu0 0
        %549 = vmatpush1.bf16.msra.mxu0 %v442
        %550 = vmatprep.subr.bf16.mxu0 0
        %551 = vmatpush1.bf16.msra.mxu0 0
        %552 = vmatprep.subr.bf16.mxu0 0
        %553 = vmatpush1.bf16.msra.mxu0 0
        %554 = vmatprep.subr.bf16.mxu0 0
        %555 = vmatpush1.bf16.msra.mxu0 0
        %556 = vmatprep.subr.bf16.mxu0 0
        %557 = vmatpush1.bf16.msra.mxu0 0
        %558 = vmatprep.subr.bf16.mxu0 0
        %559 = vmatpush1.bf16.msra.mxu0 0
        %560 = vmatprep.subr.bf16.mxu0 0
        %561 = vmatpush1.bf16.msra.mxu0 0
        %562 = vmatprep.subr.bf16.mxu0 0
        %563 = vmatpush1.bf16.msra.mxu0 0
        %564 = vmatprep.subr.bf16.mxu0 0
        %565 = vmatpush1.bf16.msra.mxu0 0
        %566 = vmatprep.subr.bf16.mxu0 0
        %567 = vmatpush1.bf16.msra.mxu0 0
        %568 = vmatprep.subr.bf16.mxu0 0
        %569 = vmatpush1.bf16.msra.mxu0 0
        %570 = vmatprep.subr.bf16.mxu0 0
        %571 = vmatpush1.bf16.msra.mxu0 0
        %572 = vmatprep.subr.bf16.mxu0 0
        %573 = vmatpush1.bf16.msra.mxu0 0
        %574 = vmatprep.subr.bf16.mxu0 0
        %575 = vmatpush1.bf16.msra.mxu0 0
        %576 = vmatprep.subr.bf16.mxu0 0
        %577 = vmatpush1.bf16.msra.mxu0 0
        %578 = vmatprep.subr.bf16.mxu0 0
        %579 = vmatpush1.bf16.msra.mxu0 0
        %580 = vmatprep.mubr.bf16.mxu0 0
        %581 = vmatmul.mubr.bf16.gmra.mrb[0].mxu0 %v546
        %v582 = vpop.f32.mrb[0].mxu0
        %v583 = vadd.f32 0.0, %v582
        %v584 = vpop.f32.mrb[0].mxu0
        %v585 = vpop.f32.mrb[0].mxu0
        %v586 = vadd.f32 0.0, %v585
        %v587 = vpop.f32.mrb[0].mxu0
        %588 = vdwg.mxu0
        %v590 = vsel %vm456, %v455, 0
        %592 = vmatprep.subr.bf16.mxu0 0
        %593 = vmatpush1.bf16.msra.mxu0 %v443
        %594 = vmatprep.subr.bf16.mxu0 0
        %595 = vmatpush1.bf16.msra.mxu0 0
        %596 = vmatprep.subr.bf16.mxu0 0
        %597 = vmatpush1.bf16.msra.mxu0 0
        %598 = vmatprep.subr.bf16.mxu0 0
        %599 = vmatpush1.bf16.msra.mxu0 0
        %600 = vmatprep.subr.bf16.mxu0 0
        %601 = vmatpush1.bf16.msra.mxu0 0
        %602 = vmatprep.subr.bf16.mxu0 0
        %603 = vmatpush1.bf16.msra.mxu0 0
        %604 = vmatprep.subr.bf16.mxu0 0
        %605 = vmatpush1.bf16.msra.mxu0 0
        %606 = vmatprep.subr.bf16.mxu0 0
        %607 = vmatpush1.bf16.msra.mxu0 0
        %608 = vmatprep.subr.bf16.mxu0 0
        %609 = vmatpush1.bf16.msra.mxu0 0
        %610 = vmatprep.subr.bf16.mxu0 0
        %611 = vmatpush1.bf16.msra.mxu0 0
        %612 = vmatprep.subr.bf16.mxu0 0
        %613 = vmatpush1.bf16.msra.mxu0 0
        %614 = vmatprep.subr.bf16.mxu0 0
        %615 = vmatpush1.bf16.msra.mxu0 0
        %616 = vmatprep.subr.bf16.mxu0 0
        %617 = vmatpush1.bf16.msra.mxu0 0
        %618 = vmatprep.subr.bf16.mxu0 0
        %619 = vmatpush1.bf16.msra.mxu0 0
        %620 = vmatprep.subr.bf16.mxu0 0
        %621 = vmatpush1.bf16.msra.mxu0 0
        %622 = vmatprep.subr.bf16.mxu0 0
        %623 = vmatpush1.bf16.msra.mxu0 0
        %624 = vmatprep.mubr.bf16.mxu0 0
        %625 = vmatmul.mubr.bf16.gmra.mrb[0].mxu0 %v590
        %v626 = vpop.f32.mrb[0].mxu0
        %v627 = vadd.f32 0.0, %v626
        %v628 = vpop.f32.mrb[0].mxu0
        %v629 = vpop.f32.mrb[0].mxu0
        %v630 = vadd.f32 0.0, %v629
        %v631 = vpop.f32.mrb[0].mxu0
        %632 = vdwg.mxu0
        %v633 = vmax.f32 %v495, 1.0
        %v634 = vmax.f32 %v498, 1.0
        %v635 = vmax.f32 %v539, 1.0
        %v636 = vmax.f32 %v542, 1.0
        %v637 = vmax.f32 %v583, 1.0
        %v638 = vmax.f32 %v586, 1.0
        %v639 = vmax.f32 %v627, 1.0
        %v640 = vmax.f32 %v630, 1.0
        %v641 = vrcp.pop %v633
        %v642 = vrcp.pop %v634
        %v643 = vrcp.pop %v635
        %v644 = vrcp.pop %v636
        %v645 = vrcp.pop %v637
        %v646 = vrcp.pop %v638
        %v647 = vrcp.pop %v639
        %v648 = vrcp.pop %v640
        %650 = vset.pattern.permute.xlu0 32
        %651 = vperm.xlu0 %650, %v641
        %v652 = vpop.permute.xlu0 %651
        %655 = vset.pattern.permute.xlu0 32
        %656 = vperm.xlu0 %655, %v642
        %v657 = vpop.permute.xlu0 %656
        %660 = vset.pattern.permute.xlu0 32
        %661 = vperm.xlu0 %660, %v643
        %v662 = vpop.permute.xlu0 %661
        %665 = vset.pattern.permute.xlu0 32
        %666 = vperm.xlu0 %665, %v644
        %v667 = vpop.permute.xlu0 %666
        %670 = vset.pattern.permute.xlu0 32
        %671 = vperm.xlu0 %670, %v645
        %v672 = vpop.permute.xlu0 %671
        %675 = vset.pattern.permute.xlu0 32
        %676 = vperm.xlu0 %675, %v646
        %v677 = vpop.permute.xlu0 %676
        %680 = vset.pattern.permute.xlu0 32
        %681 = vperm.xlu0 %680, %v647
        %v682 = vpop.permute.xlu0 %681
        %685 = vset.pattern.permute.xlu0 32
        %686 = vperm.xlu0 %685, %v648
        %v687 = vpop.permute.xlu0 %686
        %v689 = vmul.f32 %v495, %v652
        %v690 = vmul.f32 %v498, %v657
        %v691 = vmul.f32 %v539, %v662
        %v692 = vmul.f32 %v542, %v667
        %v693 = vmul.f32 %v583, %v672
        %v694 = vmul.f32 %v586, %v677
        %v695 = vmul.f32 %v627, %v682
        %v696 = vmul.f32 %v630, %v687
        %v697 = vadd.f32 %v689, %v393
        %v698 = vadd.f32 %v690, %v397
        %v699 = vadd.f32 %v691, %v403
        %v700 = vadd.f32 %v692, %v407
        %v701 = vadd.f32 %v693, %v413
        %v702 = vadd.f32 %v694, %v417
        %v703 = vadd.f32 %v695, %v423
        %v704 = vadd.f32 %v696, %v427
        %v705 = vld [vmem:[%s3] sm:$0x1]
        %v707 = vlaneseq
        %v708 = vshrl.u32 %v707, 7
        %v709 = vsub.s32 0, %v708
        %v710 = vrot.slane %v705, %v709
        %v712 = vadd.f32 %v697, %v710
        %v713 = vadd.f32 %v698, %v710
        %v714 = vadd.f32 %v699, %v710
        %v715 = vadd.f32 %v700, %v710
        %v716 = vadd.f32 %v701, %v710
        %v717 = vadd.f32 %v702, %v710
        %v718 = vadd.f32 %v703, %v710
        %v719 = vadd.f32 %v704, %v710
        %720 = vst [vmem:[%s211] sm:$0xff] %v712
        %721 = vst [vmem:[%s211 + $0x8] sm:$0xff] %v713
        %722 = vst [vmem:[%s211 + $0x10] sm:$0xff] %v714
        %723 = vst [vmem:[%s211 + $0x18] sm:$0xff] %v715
        %724 = vst [vmem:[%s211 + $0x20] sm:$0xff] %v716
        %725 = vst [vmem:[%s211 + $0x28] sm:$0xff] %v717
        %726 = vst [vmem:[%s211 + $0x30] sm:$0xff] %v718
        %727 = vst [vmem:[%s211 + $0x38] sm:$0xff] %v719
        %s728 = sand.u32 %s120, 1
        %s729 = scalar_lea.sflag [#allocation3], %s728
        %s730 = sand.u32 %s120, 1
        %s731 = smul.addr %s730, 64
        %s732 = scalar_lea.vmem [#allocation2], %s731
        // Predicated region
        $region37: #{dense_graph_conv.1} parent=35 // pred_check
          %p733 = pneg %p130
        $region38: #{dense_graph_conv.1} parent=35 // pred_check_branch
          %735 = sbr.rel (%p733) target = $region40
        $region39: #{dense_graph_conv.1} parent=35 // pred_region
          %s736 = smul.u32 4, %s18
          %s738 = ssub.s32 1024, 1024
          %739 = vsyncadd %s729, %s738
          %s740 = smul.addr %s736, 2
          %s741 = smul.addr %s740, 128
          %s742 = scalar_lea.hbm %s4, %s741
          %s743 = sshll.u32 %s732, 4
          %s744 = int_to_ptr.vmem [resolvable:$true] %s743
          %749 = dma.vmem_to_hbm [thread:$0]  %s744, 1024, %s742, %s729, 128, 128, 8
        $region40: #{dense_graph_conv.1} parent=35 // pred_fallthru
          _
      $region36: #{dense_graph_conv.1} parent=5 // pred_fallthru
        _
      %p750 = scmp.le.s32.totalorder 2, %s13
      // Predicated region
      $region41: #{dense_graph_conv.1} parent=5 // pred_check
        %p751 = pneg %p750
      $region42: #{dense_graph_conv.1} parent=5 // pred_check_branch
        %753 = sbr.rel (%p751) target = $region44
      $region43: #{dense_graph_conv.1} parent=5 // pred_region
        %s754 = ssub.s32 %s13, 2
        // Predicated region
        $region45: #{dense_graph_conv.1} parent=43 // pred_check
          %p755 = pneg %p136
        $region46: #{dense_graph_conv.1} parent=43 // pred_check_branch
          %757 = sbr.rel (%p755) target = $region48
        $region47: #{dense_graph_conv.1} parent=43 // pred_region
          %s758 = sand.u32 %s121, 1
          %s759 = scalar_lea.sflag [#allocation3], %s758
          %s760 = sand.u32 %s121, 1
          %s761 = smul.addr %s760, 64
          %s762 = scalar_lea.vmem [#allocation2], %s761
          %763 = dma.done %s759, 1024
        $region48: #{dense_graph_conv.1} parent=43 // pred_fallthru
          _
      $region44: #{dense_graph_conv.1} parent=5 // pred_fallthru
        _
    $region6: #{dense_graph_conv.1} parent=1 // loop_footer
      %s17 = sadd.s32 1, %s13
    $region7: #{dense_graph_conv.1} parent=1 // loop_footer_branch
      %12 = sbr.rel target = $region3
    $region8: #{dense_graph_conv.1} parent=1 // loop_exit
      _
    %764 = vsyncpa [#allocation3], 1
    %s765 = scalar_lea.sflag [#allocation3], 1
    %766 = vsyncpa %s765, 1

</llo_original>
